<compile_context>
chip_gen: v7x
topology: tpu7x:2x2x1
jax: 0.10.0
libtpu: 0.0.40
codegen_flags: <defaults>
</compile_context>

<pallas_src>
import jax
import jax.numpy as jnp
from jax.experimental import pallas as pl
from jax.experimental.pallas import tpu as pltpu


# ---------------------------------------------------------------------------
# Pallas kernel: full Critic forward (per batch tile) in one pass.
# ---------------------------------------------------------------------------
def _critic_kernel(sa_ref, env_ref,
                   w1s_ref, w1e_ref, b1_ref,
                   w2h_ref, w2a_ref, b2_ref,
                   w3_ref, b3_ref,
                   out_ref):
    sa = sa_ref[...]                 # [TILE_B, 2]  (packed state / action)
    state = sa[:, 0:1]               # [TILE_B, 1]
    action = sa[:, 1:2]              # [TILE_B, 1]

    # fc1: relu(cat([state, env_embed]) @ W1 + b1)
    #    = relu(env_embed @ W1e (MXU, bf16) + state ⊗ w1s_row (VPU) + b1)
    h1 = jnp.dot(env_ref[...].astype(jnp.bfloat16),
                 w1e_ref[...].astype(jnp.bfloat16),
                 preferred_element_type=jnp.float32)
    h1 = h1 + state * w1s_ref[...] + b1_ref[...]
    h1 = jnp.maximum(h1, 0.0)

    # fc2: relu(cat([h1, action]) @ W2 + b2)
    #    = relu(h1 @ W2h (MXU, bf16) + action ⊗ w2a_row (VPU) + b2)
    h2 = jnp.dot(h1.astype(jnp.bfloat16),
                 w2h_ref[...].astype(jnp.bfloat16),
                 preferred_element_type=jnp.float32)
    h2 = h2 + action * w2a_ref[...] + b2_ref[...]
    h2 = jnp.maximum(h2, 0.0)

    # fc3: q = h2 @ W3 + b3 -> VPU multiply + lane reduction (XLU), no MXU.
    # b3 is a scalar read from SMEM.
    q = jnp.sum(h2 * w3_ref[...], axis=-1, keepdims=True) + b3_ref[0]
    out_ref[...] = q.astype(out_ref.dtype)


def _choose_tile_b(B, tile_b):
    """Pick a batch tile that satisfies the sublane (8) rule with no padding."""
    if B < 8:
        return B                               # full-extent block
    t = min(tile_b, (B // 8) * 8)              # multiple of 8, <= B
    # v7x has 2 TensorCores that shard the "parallel" grid axis: keep at
    # least 2 grid steps when there is enough work.  On v5e/v6e the extra
    # step costs ~0.35 us, which is negligible.
    if B >= 512 and pl.cdiv(B, t) == 1:
        t = ((t + 15) // 16) * 8               # ~half, rounded to multiple of 8
    return t


def critic_forward(state, action, env_embed, params, *, tile_b=1024):
    """Run the Pallas Critic kernel.

    state:     [B, 1]
    action:    [B, 1]
    env_embed: [B, env_embed_dim]
    returns    [B, 1]
    """
    (w1s, w1e, b1, w2h, w2a, b2, w3, b3) = params

    B = state.shape[0]
    E = env_embed.shape[1]
    H = w1e.shape[1]

    # The rank-1 VPU path assumes state_dim == action_dim == 1 (as in the
    # PyTorch module, which hardcodes state_dim = action_dim = 1).
    assert state.shape[1] == 1 and action.shape[1] == 1
    assert w1s.shape == (1, H) and w2a.shape == (1, H)

    # Pack the two width-1 streams into one [B, 2] input (one DMA stream).
    sa = jnp.concatenate([state, action], axis=1)
    # fc3 weight as a lane-dense [1, H] row; fc3 bias as an SMEM scalar.
    w3_row = w3.reshape(1, H)
    b3_s = b3.reshape(1)

    TILE_B = _choose_tile_b(B, tile_b)
    grid = (pl.cdiv(B, TILE_B),)   # partial last block handled by Pallas

    def batch_spec(d):
        return pl.BlockSpec((TILE_B, d), lambda i: (i, 0))

    def const_spec(r, c):
        # Weights / biases: same block for every grid step (VMEM-resident).
        return pl.BlockSpec((r, c), lambda i: (0, 0))

    out = pl.pallas_call(
        _critic_kernel,
        out_shape=jax.ShapeDtypeStruct((B, 1), jnp.float32),
        grid=grid,
        in_specs=[
            batch_spec(2),        # packed [state, action]
            batch_spec(E),        # env_embed
            const_spec(1, H),     # w1s row   (state part of fc1)
            const_spec(E, H),     # w1e       (env part of fc1)
            const_spec(1, H),     # b1
            const_spec(H, H),     # w2h       (hidden part of fc2)
            const_spec(1, H),     # w2a row   (action part of fc2)
            const_spec(1, H),     # b2
            const_spec(1, H),     # w3 row    (fc3 weight as a row)
            pl.BlockSpec(memory_space=pltpu.MemorySpace.SMEM),  # b3 scalar
        ],
        out_specs=batch_spec(1),
        compiler_params=pltpu.CompilerParams(
            dimension_semantics=("parallel",)),
    )(sa, env_embed, w1s, w1e, b1, w2h, w2a, b2, w3_row, b3_s)

    return out


# ---------------------------------------------------------------------------
# Deterministic parameter construction (mirrors nn.Linear shapes).
# ---------------------------------------------------------------------------
def init_params(key, state_dim, action_dim, env_embed_dim, hidden=128):
    ks = jax.random.split(key, 6)

    def uniform(k, shape, fan_in):
        bound = 1.0 / jnp.sqrt(jnp.float32(fan_in))
        return jax.random.uniform(k, shape, jnp.float32, -bound, bound)

    in1 = state_dim + env_embed_dim
    in2 = hidden + action_dim

    # fc1: [in1, 128]  split into state part / env part
    w1 = uniform(ks[0], (in1, hidden), in1)
    b1 = uniform(ks[1], (1, hidden), in1)
    w1s, w1e = w1[:state_dim, :], w1[state_dim:, :]

    # fc2: [in2, 128]  split into hidden part / action part
    w2 = uniform(ks[2], (in2, hidden), in2)
    b2 = uniform(ks[3], (1, hidden), in2)
    w2h, w2a = w2[:hidden, :], w2[hidden:, :]

    # fc3: [128, 1]
    w3 = uniform(ks[4], (hidden, 1), hidden)
    b3 = uniform(ks[5], (1, 1), hidden)

    return (w1s, w1e, b1, w2h, w2a, b2, w3, b3)


def critic_reference(state, action, env_embed, params):
    """Pure-JAX f32 reference matching the PyTorch forward exactly."""
    (w1s, w1e, b1, w2h, w2a, b2, w3, b3) = params
    x = jnp.concatenate([state, env_embed], axis=-1)
    w1 = jnp.concatenate([w1s, w1e], axis=0)
    x = jax.nn.relu(x @ w1 + b1)
    x = jnp.concatenate([x, action], axis=-1)
    w2 = jnp.concatenate([w2h, w2a], axis=0)
    x = jax.nn.relu(x @ w2 + b2)
    return x @ w3 + b3


if __name__ == "__main__":
    state_dim = 1
    action_dim = 1
    env_embed_dim = 32

    key = jax.random.PRNGKey(0)
    k_p, k_s, k_a, k_e = jax.random.split(key, 4)
    params = init_params(k_p, state_dim, action_dim, env_embed_dim)

    # bf16 MXU operands -> compare against the f32 reference with a loose
    # tolerance (per review: ~1e-2 is fine for a critic head).
    ATOL, RTOL = 5e-2, 1e-2

    # --- small case (single full block, B=8) ---------------------------------
    batch = 8
    state = jax.random.normal(k_s, (batch, state_dim), jnp.float32)
    action = jax.random.normal(k_a, (batch, action_dim), jnp.float32)
    env_embed = jax.random.normal(k_e, (batch, env_embed_dim), jnp.float32)

    q = jax.block_until_ready(critic_forward(state, action, env_embed, params))
    q_ref = critic_reference(state, action, env_embed, params)
    assert q.shape == (batch, action_dim)
    assert jnp.allclose(q, q_ref, atol=ATOL, rtol=RTOL)

    # --- larger case (batch tiling, partial last block, 2-step parallel grid) -
    batch2 = 1000
    k_s2, k_a2, k_e2 = jax.random.split(k_s, 3)
    state2 = jax.random.normal(k_s2, (batch2, state_dim), jnp.float32)
    action2 = jax.random.normal(k_a2, (batch2, action_dim), jnp.float32)
    env_embed2 = jax.random.normal(k_e2, (batch2, env_embed_dim), jnp.float32)

    q2 = jax.block_until_ready(
        critic_forward(state2, action2, env_embed2, params))
    q2_ref = critic_reference(state2, action2, env_embed2, params)
    assert q2.shape == (batch2, 1)
    assert jnp.allclose(q2, q2_ref, atol=ATOL, rtol=RTOL)

    print("KERNEL_OK")
</pallas_src>

<mosaic_0001>
module attributes {stable_mosaic.version = 11 : i64} {
  func.func @_critic_kernel(%arg0: i32, %arg1: memref<8x2xf32, #tpu.memory_space<vmem>>, %arg2: memref<8x32xf32, #tpu.memory_space<vmem>>, %arg3: memref<1x128xf32, #tpu.memory_space<vmem>>, %arg4: memref<32x128xf32, #tpu.memory_space<vmem>>, %arg5: memref<1x128xf32, #tpu.memory_space<vmem>>, %arg6: memref<128x128xf32, #tpu.memory_space<vmem>>, %arg7: memref<1x128xf32, #tpu.memory_space<vmem>>, %arg8: memref<1x128xf32, #tpu.memory_space<vmem>>, %arg9: memref<1x128xf32, #tpu.memory_space<vmem>>, %arg10: memref<1xf32, #tpu.memory_space<smem>>, %arg11: memref<8x1xf32, #tpu.memory_space<vmem>>) attributes {dimension_semantics = [#tpu.dimension_semantics<parallel>], iteration_bounds = array<i64: 1>, scalar_prefetch = 0 : i64, scratch_operands = 0 : i64, tpu.core_type = #tpu.core_type<tc>, window_params = [{transform_indices = @transform_0, window_bounds = array<i64: 8, 2>}, {transform_indices = @transform_1, window_bounds = array<i64: 8, 32>}, {pipeline_mode = #tpu.pipeline_mode<synchronous>, transform_indices = @transform_2, window_bounds = array<i64: 1, 128>}, {pipeline_mode = #tpu.pipeline_mode<synchronous>, transform_indices = @transform_3, window_bounds = array<i64: 32, 128>}, {pipeline_mode = #tpu.pipeline_mode<synchronous>, transform_indices = @transform_4, window_bounds = array<i64: 1, 128>}, {pipeline_mode = #tpu.pipeline_mode<synchronous>, transform_indices = @transform_5, window_bounds = array<i64: 128, 128>}, {pipeline_mode = #tpu.pipeline_mode<synchronous>, transform_indices = @transform_6, window_bounds = array<i64: 1, 128>}, {pipeline_mode = #tpu.pipeline_mode<synchronous>, transform_indices = @transform_7, window_bounds = array<i64: 1, 128>}, {pipeline_mode = #tpu.pipeline_mode<synchronous>, transform_indices = @transform_8, window_bounds = array<i64: 1, 128>}, {transform_indices = @transform_9, window_bounds = array<i64: 1>}, {transform_indices = @transform_10, window_bounds = array<i64: 8, 1>}]} {
    %c0 = arith.constant 0 : index
    %c0_0 = arith.constant 0 : index
    %0 = vector.load %arg1[%c0, %c0_0] : memref<8x2xf32, #tpu.memory_space<vmem>>, vector<8x2xf32>
    %1 = vector.extract_strided_slice %0 {offsets = [0, 0], sizes = [8, 1], strides = [1, 1]} : vector<8x2xf32> to vector<8x1xf32>
    %2 = vector.extract_strided_slice %0 {offsets = [0, 1], sizes = [8, 1], strides = [1, 1]} : vector<8x2xf32> to vector<8x1xf32>
    %c0_1 = arith.constant 0 : index
    %c0_2 = arith.constant 0 : index
    %3 = vector.load %arg2[%c0_1, %c0_2] : memref<8x32xf32, #tpu.memory_space<vmem>>, vector<8x32xf32>
    %4 = arith.truncf %3 : vector<8x32xf32> to vector<8x32xbf16>
    %c0_3 = arith.constant 0 : index
    %c0_4 = arith.constant 0 : index
    %5 = vector.load %arg4[%c0_3, %c0_4] : memref<32x128xf32, #tpu.memory_space<vmem>>, vector<32x128xf32>
    %6 = arith.truncf %5 : vector<32x128xf32> to vector<32x128xbf16>
    %cst = arith.constant dense<0.000000e+00> : vector<8x128xf32>
    %7 = tpu.matmul %4, %6, %cst {dimension_numbers = #tpu.dot_dimension_numbers<[1], [0], [0], [1], [0, 0, 1, 1], [], []>} : vector<8x32xbf16>, vector<32x128xbf16>, vector<8x128xf32> -> vector<8x128xf32>
    %c0_5 = arith.constant 0 : index
    %c0_6 = arith.constant 0 : index
    %8 = vector.load %arg3[%c0_5, %c0_6] : memref<1x128xf32, #tpu.memory_space<vmem>>, vector<1x128xf32>
    %9 = vector.broadcast %1 : vector<8x1xf32> to vector<8x128xf32>
    %10 = vector.broadcast %8 : vector<1x128xf32> to vector<8x128xf32>
    %11 = arith.mulf %9, %10 : vector<8x128xf32>
    %12 = arith.addf %7, %11 : vector<8x128xf32>
    %c0_7 = arith.constant 0 : index
    %c0_8 = arith.constant 0 : index
    %13 = vector.load %arg5[%c0_7, %c0_8] : memref<1x128xf32, #tpu.memory_space<vmem>>, vector<1x128xf32>
    %14 = vector.broadcast %13 : vector<1x128xf32> to vector<8x128xf32>
    %15 = arith.addf %12, %14 : vector<8x128xf32>
    %cst_9 = arith.constant 0.000000e+00 : f32
    %16 = vector.broadcast %cst_9 : f32 to vector<8x128xf32>
    %17 = arith.maximumf %15, %16 : vector<8x128xf32>
    %18 = arith.truncf %17 : vector<8x128xf32> to vector<8x128xbf16>
    %c0_10 = arith.constant 0 : index
    %c0_11 = arith.constant 0 : index
    %19 = vector.load %arg6[%c0_10, %c0_11] : memref<128x128xf32, #tpu.memory_space<vmem>>, vector<128x128xf32>
    %20 = arith.truncf %19 : vector<128x128xf32> to vector<128x128xbf16>
    %cst_12 = arith.constant dense<0.000000e+00> : vector<8x128xf32>
    %21 = tpu.matmul %18, %20, %cst_12 {dimension_numbers = #tpu.dot_dimension_numbers<[1], [0], [0], [1], [0, 0, 1, 1], [], []>} : vector<8x128xbf16>, vector<128x128xbf16>, vector<8x128xf32> -> vector<8x128xf32>
    %c0_13 = arith.constant 0 : index
    %c0_14 = arith.constant 0 : index
    %22 = vector.load %arg7[%c0_13, %c0_14] : memref<1x128xf32, #tpu.memory_space<vmem>>, vector<1x128xf32>
    %23 = vector.broadcast %2 : vector<8x1xf32> to vector<8x128xf32>
    %24 = vector.broadcast %22 : vector<1x128xf32> to vector<8x128xf32>
    %25 = arith.mulf %23, %24 : vector<8x128xf32>
    %26 = arith.addf %21, %25 : vector<8x128xf32>
    %c0_15 = arith.constant 0 : index
    %c0_16 = arith.constant 0 : index
    %27 = vector.load %arg8[%c0_15, %c0_16] : memref<1x128xf32, #tpu.memory_space<vmem>>, vector<1x128xf32>
    %28 = vector.broadcast %27 : vector<1x128xf32> to vector<8x128xf32>
    %29 = arith.addf %26, %28 : vector<8x128xf32>
    %cst_17 = arith.constant 0.000000e+00 : f32
    %30 = vector.broadcast %cst_17 : f32 to vector<8x128xf32>
    %31 = arith.maximumf %29, %30 : vector<8x128xf32>
    %c0_18 = arith.constant 0 : index
    %c0_19 = arith.constant 0 : index
    %32 = vector.load %arg9[%c0_18, %c0_19] : memref<1x128xf32, #tpu.memory_space<vmem>>, vector<1x128xf32>
    %33 = vector.broadcast %32 : vector<1x128xf32> to vector<8x128xf32>
    %34 = arith.mulf %31, %33 : vector<8x128xf32>
    %cst_20 = arith.constant dense<0.000000e+00> : vector<8xf32>
    %35 = vector.multi_reduction <add>, %34, %cst_20 [1] : vector<8x128xf32> to vector<8xf32>
    %36 = vector.shape_cast %35 : vector<8xf32> to vector<8x1xf32>
    %c0_21 = arith.constant 0 : index
    %37 = memref.load %arg10[%c0_21] : memref<1xf32, #tpu.memory_space<smem>>
    %38 = vector.broadcast %37 : f32 to vector<8x1xf32>
    %39 = arith.addf %36, %38 : vector<8x1xf32>
    %c0_22 = arith.constant 0 : index
    %c0_23 = arith.constant 0 : index
    %40 = vector.load %arg11[%c0_22, %c0_23] : memref<8x1xf32, #tpu.memory_space<vmem>>, vector<8x1xf32>
    tpu.vector_store %arg11[%c0_22, %c0_23], %39 {strides = array<i32>} : memref<8x1xf32, #tpu.memory_space<vmem>>, vector<8x1xf32>,
    return
  }
  func.func @transform_0(%arg0: i32) -> (i32, i32) {
    %c0_i32 = arith.constant 0 : i32
    %c0_i32_0 = arith.constant 0 : i32
    return %arg0, %c0_i32 : i32, i32
  }
  func.func @transform_1(%arg0: i32) -> (i32, i32) {
    %c0_i32 = arith.constant 0 : i32
    %c0_i32_0 = arith.constant 0 : i32
    return %arg0, %c0_i32 : i32, i32
  }
  func.func @transform_2(%arg0: i32) -> (i32, i32) {
    %c0_i32 = arith.constant 0 : i32
    %c0_i32_0 = arith.constant 0 : i32
    %c0_i32_1 = arith.constant 0 : i32
    return %c0_i32, %c0_i32_0 : i32, i32
  }
  func.func @transform_3(%arg0: i32) -> (i32, i32) {
    %c0_i32 = arith.constant 0 : i32
    %c0_i32_0 = arith.constant 0 : i32
    %c0_i32_1 = arith.constant 0 : i32
    return %c0_i32, %c0_i32_0 : i32, i32
  }
  func.func @transform_4(%arg0: i32) -> (i32, i32) {
    %c0_i32 = arith.constant 0 : i32
    %c0_i32_0 = arith.constant 0 : i32
    %c0_i32_1 = arith.constant 0 : i32
    return %c0_i32, %c0_i32_0 : i32, i32
  }
  func.func @transform_5(%arg0: i32) -> (i32, i32) {
    %c0_i32 = arith.constant 0 : i32
    %c0_i32_0 = arith.constant 0 : i32
    %c0_i32_1 = arith.constant 0 : i32
    return %c0_i32, %c0_i32_0 : i32, i32
  }
  func.func @transform_6(%arg0: i32) -> (i32, i32) {
    %c0_i32 = arith.constant 0 : i32
    %c0_i32_0 = arith.constant 0 : i32
    %c0_i32_1 = arith.constant 0 : i32
    return %c0_i32, %c0_i32_0 : i32, i32
  }
  func.func @transform_7(%arg0: i32) -> (i32, i32) {
    %c0_i32 = arith.constant 0 : i32
    %c0_i32_0 = arith.constant 0 : i32
    %c0_i32_1 = arith.constant 0 : i32
    return %c0_i32, %c0_i32_0 : i32, i32
  }
  func.func @transform_8(%arg0: i32) -> (i32, i32) {
    %c0_i32 = arith.constant 0 : i32
    %c0_i32_0 = arith.constant 0 : i32
    %c0_i32_1 = arith.constant 0 : i32
    return %c0_i32, %c0_i32_0 : i32, i32
  }
  func.func @transform_9(%arg0: i32) -> i32 {
    %c0_i32 = arith.constant 0 : i32
    %c0_i32_0 = arith.constant 0 : i32
    return %c0_i32 : i32
  }
  func.func @transform_10(%arg0: i32) -> (i32, i32) {
    %c0_i32 = arith.constant 0 : i32
    %c0_i32_0 = arith.constant 0 : i32
    return %arg0, %c0_i32 : i32, i32
  }
}

</mosaic_0001>

<llo_original>
// kernel: tpu_custom_call.1
$region0: #{tpu_custom_call.1}
  #allocation0 [shape = 'u32[]', space=smem, size = 0x4, offset = 0x4, fixed_abs, tag = 'smem constant byte address 0x4 - core index']
  #allocation1 [shape = 'u32[144,128]{1,0:T(1,128)}', space=vmem, size = 0x12000, scoped, tag = 'internal scratch']
  #allocation2 [shape = 'f32[1]{0:T(128)S(6)}', space=smem, size = 0x200, scoped, tag = 'scoped memory for tpu_custom_call.1']
  %s0 = inlined_call_operand.vmem [shape: f32[8,2], index: 0, kind: input, shape index: {}]
  %s1 = inlined_call_operand.vmem [shape: f32[8,32], index: 1, kind: input, shape index: {}]
  %s2 = inlined_call_operand.vmem [shape: f32[1,128], index: 2, kind: input, shape index: {}]
  %s3 = inlined_call_operand.hbm [shape: f32[32,128], index: 3, kind: input, shape index: {}]
  %s4 = inlined_call_operand.vmem [shape: f32[1,128], index: 4, kind: input, shape index: {}]
  %s5 = inlined_call_operand.hbm [shape: f32[128,128], index: 5, kind: input, shape index: {}]
  %s6 = inlined_call_operand.vmem [shape: f32[1,128], index: 6, kind: input, shape index: {}]
  %s7 = inlined_call_operand.vmem [shape: f32[1,128], index: 7, kind: input, shape index: {}]
  %s8 = inlined_call_operand.vmem [shape: f32[1,128], index: 8, kind: input, shape index: {}]
  %s9 = inlined_call_operand.<no memory space> [shape: f32[1], index: 9, kind: input, shape index: {}]
  %s10 = inlined_call_operand.vmem [shape: f32[8,1], index: 10, kind: output, shape index: {}]
  %s11 = sld [smem:[#allocation0]]
  $region58: #{tpu_custom_call.1} parent=0
    _
  %s13 = ssub.s32 1, %s11
  %s14 = scalar_select 0, %s13, %s11
  %15 = sst [smem:[#allocation2]] %s9
  $region1: #{tpu_custom_call.1} parent=0
    #allocation3 [shape = 'u8[16384]{0}', space=vmem, size = 0x4000, scoped, tag = 'input window, operand 3, single buffered']
    #allocation4 [shape = 's32[1]{0}', space=sflag, size = 0x4, scoped, tag = 'scoped memory for tpu_custom_call.1']
    #allocation5 [shape = 'u8[65536]{0}', space=vmem, size = 0x10000, scoped, tag = 'input window, operand 5, single buffered']
    #allocation6 [shape = 's32[1]{0}', space=sflag, size = 0x4, scoped, tag = 'scoped memory for tpu_custom_call.1']
    %16 = vsyncpa [#allocation4], 0
    %17 = vsyncpa [#allocation6], 0
    // Predicated region
    $region2: #{tpu_custom_call.1} parent=1 // pred_check
      _
    $region3: #{tpu_custom_call.1} parent=1 // pred_check_branch
      %19 = sbr.rel (0) target = $region5
    $region4: #{tpu_custom_call.1} parent=1 // pred_region
      _
    $region5: #{tpu_custom_call.1} parent=1 // pred_fallthru
      _
    // Predicated region
    $region6: #{tpu_custom_call.1} parent=1 // pred_check
      _
    $region7: #{tpu_custom_call.1} parent=1 // pred_check_branch
      %21 = sbr.rel (0) target = $region9
    $region8: #{tpu_custom_call.1} parent=1 // pred_region
      _
    $region9: #{tpu_custom_call.1} parent=1 // pred_fallthru
      _
    // Predicated region
    $region10: #{tpu_custom_call.1} parent=1 // pred_check
      _
    $region11: #{tpu_custom_call.1} parent=1 // pred_check_branch
      %23 = sbr.rel (0) target = $region13
    $region12: #{tpu_custom_call.1} parent=1 // pred_region
      _
    $region13: #{tpu_custom_call.1} parent=1 // pred_fallthru
      _
    // Predicated region
    $region14: #{tpu_custom_call.1} parent=1 // pred_check
      _
    $region15: #{tpu_custom_call.1} parent=1 // pred_check_branch
      %25 = sbr.rel (0) target = $region17
    $region16: #{tpu_custom_call.1} parent=1 // pred_region
      %s27 = ssub.s32 512, 512
      %28 = vsyncadd [#allocation4], %s27
      %s29 = sshll.u32 [#allocation3], 4
      %s30 = int_to_ptr.vmem [resolvable:$true] %s29
      %35 = dma.hbm_to_vmem [thread:$0]  %s3, 512, %s30, [#allocation4], 128, 128, 8
    $region17: #{tpu_custom_call.1} parent=1 // pred_fallthru
      _
    // Predicated region
    $region18: #{tpu_custom_call.1} parent=1 // pred_check
      _
    $region19: #{tpu_custom_call.1} parent=1 // pred_check_branch
      %37 = sbr.rel (0) target = $region21
    $region20: #{tpu_custom_call.1} parent=1 // pred_region
      _
    $region21: #{tpu_custom_call.1} parent=1 // pred_fallthru
      _
    // Predicated region
    $region22: #{tpu_custom_call.1} parent=1 // pred_check
      _
    $region23: #{tpu_custom_call.1} parent=1 // pred_check_branch
      %39 = sbr.rel (0) target = $region25
    $region24: #{tpu_custom_call.1} parent=1 // pred_region
      %s41 = ssub.s32 2048, 2048
      %42 = vsyncadd [#allocation6], %s41
      %s43 = sshll.u32 [#allocation5], 4
      %s44 = int_to_ptr.vmem [resolvable:$true] %s43
      %49 = dma.hbm_to_vmem [thread:$0]  %s5, 2048, %s44, [#allocation6], 128, 128, 8
    $region25: #{tpu_custom_call.1} parent=1 // pred_fallthru
      _
    // Predicated region
    $region26: #{tpu_custom_call.1} parent=1 // pred_check
      _
    $region27: #{tpu_custom_call.1} parent=1 // pred_check_branch
      %51 = sbr.rel (0) target = $region29
    $region28: #{tpu_custom_call.1} parent=1 // pred_region
      _
    $region29: #{tpu_custom_call.1} parent=1 // pred_fallthru
      _
    // Predicated region
    $region30: #{tpu_custom_call.1} parent=1 // pred_check
      _
    $region31: #{tpu_custom_call.1} parent=1 // pred_check_branch
      %53 = sbr.rel (0) target = $region33
    $region32: #{tpu_custom_call.1} parent=1 // pred_region
      _
    $region33: #{tpu_custom_call.1} parent=1 // pred_fallthru
      _
    // Predicated region
    $region34: #{tpu_custom_call.1} parent=1 // pred_check
      _
    $region35: #{tpu_custom_call.1} parent=1 // pred_check_branch
      %55 = sbr.rel (0) target = $region37
    $region36: #{tpu_custom_call.1} parent=1 // pred_region
      _
    $region37: #{tpu_custom_call.1} parent=1 // pred_fallthru
      _
    // Predicated region
    $region38: #{tpu_custom_call.1} parent=1 // pred_check
      _
    $region39: #{tpu_custom_call.1} parent=1 // pred_check_branch
      %57 = sbr.rel (0) target = $region41
    $region40: #{tpu_custom_call.1} parent=1 // pred_region
      _
    $region41: #{tpu_custom_call.1} parent=1 // pred_fallthru
      _
    // Predicated region
    $region42: #{tpu_custom_call.1} parent=1 // pred_check
      _
    $region43: #{tpu_custom_call.1} parent=1 // pred_check_branch
      %59 = sbr.rel (0) target = $region45
    $region44: #{tpu_custom_call.1} parent=1 // pred_region
      %60 = dma.done [#allocation4], 512
    $region45: #{tpu_custom_call.1} parent=1 // pred_fallthru
      _
    // Predicated region
    $region46: #{tpu_custom_call.1} parent=1 // pred_check
      _
    $region47: #{tpu_custom_call.1} parent=1 // pred_check_branch
      %62 = sbr.rel (0) target = $region49
    $region48: #{tpu_custom_call.1} parent=1 // pred_region
      %63 = dma.done [#allocation6], 2048
    $region49: #{tpu_custom_call.1} parent=1 // pred_fallthru
      _
    %v65 = vld [vmem:[%s0] sm:$0xff]
    %v66 = vld [vmem:[%s1] sm:$0xff]
    %v67 = vpack.c.bf16 %v66, %v66
    %v68 = vld [vmem:[#allocation3] sm:$0xff]
    %v69 = vld [vmem:[#allocation3 + $0x8] sm:$0xff]
    %v70 = vld [vmem:[#allocation3 + $0x10] sm:$0xff]
    %v71 = vld [vmem:[#allocation3 + $0x18] sm:$0xff]
    %v72 = vpack.c.bf16 %v69, %v68
    %v73 = vpack.c.bf16 %v71, %v70
    %v74 = vld [vmem:[%s2] sm:$0x1]
    %76 = vset.pattern.permute.xlu0 0
    %77 = vperm.xlu0 %76, %v65
    %v78 = vpop.permute.xlu0 %77
    %v81 = vlaneseq
    %v82 = vshrl.u32 %v81, 7
    %v83 = vsub.s32 0, %v82
    %v84 = vrot.slane %v74, %v83
    %v86 = vmul.f32 %v78, %v84
    %vm87 = vcmask 261120
    %v89 = vsel %vm87, %v67, 0
    %91 = vmatprep.subr.bf16.mxu0 0
    %92 = vmatpush1.bf16.msra.mxu0 %v72
    %93 = vmatprep.subr.bf16.mxu0 0
    %94 = vmatpush1.bf16.msra.mxu0 %v73
    %95 = vmatprep.subr.bf16.mxu0 0
    %96 = vmatpush1.bf16.msra.mxu0 0
    %97 = vmatprep.subr.bf16.mxu0 0
    %98 = vmatpush1.bf16.msra.mxu0 0
    %99 = vmatprep.subr.bf16.mxu0 0
    %100 = vmatpush1.bf16.msra.mxu0 0
    %101 = vmatprep.subr.bf16.mxu0 0
    %102 = vmatpush1.bf16.msra.mxu0 0
    %103 = vmatprep.subr.bf16.mxu0 0
    %104 = vmatpush1.bf16.msra.mxu0 0
    %105 = vmatprep.subr.bf16.mxu0 0
    %106 = vmatpush1.bf16.msra.mxu0 0
    %107 = vmatprep.subr.bf16.mxu0 0
    %108 = vmatpush1.bf16.msra.mxu0 0
    %109 = vmatprep.subr.bf16.mxu0 0
    %110 = vmatpush1.bf16.msra.mxu0 0
    %111 = vmatprep.subr.bf16.mxu0 0
    %112 = vmatpush1.bf16.msra.mxu0 0
    %113 = vmatprep.subr.bf16.mxu0 0
    %114 = vmatpush1.bf16.msra.mxu0 0
    %115 = vmatprep.subr.bf16.mxu0 0
    %116 = vmatpush1.bf16.msra.mxu0 0
    %117 = vmatprep.subr.bf16.mxu0 0
    %118 = vmatpush1.bf16.msra.mxu0 0
    %119 = vmatprep.subr.bf16.mxu0 0
    %120 = vmatpush1.bf16.msra.mxu0 0
    %121 = vmatprep.subr.bf16.mxu0 0
    %122 = vmatpush1.bf16.msra.mxu0 0
    %123 = vmatprep.mubr.bf16.mxu0 0
    %124 = vmatmul.mubr.bf16.gmra.mrb[0].mxu0 %v89
    %v125 = vpop.f32.mrb[0].mxu0
    %v126 = vadd.f32 %v86, %v125
    %v127 = vpop.f32.mrb[0].mxu0
    %v128 = vpop.f32.mrb[0].mxu0
    %v129 = vpop.f32.mrb[0].mxu0
    %130 = vdwg.mxu0
    %v131 = vld [vmem:[%s4] sm:$0x1]
    %v133 = vlaneseq
    %v134 = vshrl.u32 %v133, 7
    %v135 = vsub.s32 0, %v134
    %v136 = vrot.slane %v131, %v135
    %v138 = vadd.f32 %v126, %v136
    %v139 = vmax.f32 %v138, 0.0
    %v140 = vpack.c.bf16 %v139, %v139
    %v141 = vld [vmem:[#allocation5] sm:$0xff]
    %v142 = vld [vmem:[#allocation5 + $0x8] sm:$0xff]
    %v143 = vld [vmem:[#allocation5 + $0x10] sm:$0xff]
    %v144 = vld [vmem:[#allocation5 + $0x18] sm:$0xff]
    %v145 = vld [vmem:[#allocation5 + $0x20] sm:$0xff]
    %v146 = vld [vmem:[#allocation5 + $0x28] sm:$0xff]
    %v147 = vld [vmem:[#allocation5 + $0x30] sm:$0xff]
    %v148 = vld [vmem:[#allocation5 + $0x38] sm:$0xff]
    %v149 = vld [vmem:[#allocation5 + $0x40] sm:$0xff]
    %v150 = vld [vmem:[#allocation5 + $0x48] sm:$0xff]
    %v151 = vld [vmem:[#allocation5 + $0x50] sm:$0xff]
    %v152 = vld [vmem:[#allocation5 + $0x58] sm:$0xff]
    %v153 = vld [vmem:[#allocation5 + $0x60] sm:$0xff]
    %v154 = vld [vmem:[#allocation5 + $0x68] sm:$0xff]
    %v155 = vld [vmem:[#allocation5 + $0x70] sm:$0xff]
    %v156 = vld [vmem:[#allocation5 + $0x78] sm:$0xff]
    %v157 = vpack.c.bf16 %v142, %v141
    %v158 = vpack.c.bf16 %v144, %v143
    %v159 = vpack.c.bf16 %v146, %v145
    %v160 = vpack.c.bf16 %v148, %v147
    %v161 = vpack.c.bf16 %v150, %v149
    %v162 = vpack.c.bf16 %v152, %v151
    %v163 = vpack.c.bf16 %v154, %v153
    %v164 = vpack.c.bf16 %v156, %v155
    %v165 = vld [vmem:[%s6] sm:$0x1]
    %166 = vset.pattern.permute.xlu0 1
    %167 = vperm.xlu0 %166, %v65
    %v168 = vpop.permute.xlu0 %167
    %v171 = vlaneseq
    %v172 = vshrl.u32 %v171, 7
    %v173 = vsub.s32 0, %v172
    %v174 = vrot.slane %v165, %v173
    %v176 = vmul.f32 %v168, %v174
    %177 = vmatprep.subr.bf16.mxu0 0
    %178 = vmatpush1.bf16.msra.mxu0 %v157
    %179 = vmatprep.subr.bf16.mxu0 0
    %180 = vmatpush1.bf16.msra.mxu0 %v158
    %181 = vmatprep.subr.bf16.mxu0 0
    %182 = vmatpush1.bf16.msra.mxu0 %v159
    %183 = vmatprep.subr.bf16.mxu0 0
    %184 = vmatpush1.bf16.msra.mxu0 %v160
    %185 = vmatprep.subr.bf16.mxu0 0
    %186 = vmatpush1.bf16.msra.mxu0 %v161
    %187 = vmatprep.subr.bf16.mxu0 0
    %188 = vmatpush1.bf16.msra.mxu0 %v162
    %189 = vmatprep.subr.bf16.mxu0 0
    %190 = vmatpush1.bf16.msra.mxu0 %v163
    %191 = vmatprep.subr.bf16.mxu0 0
    %192 = vmatpush1.bf16.msra.mxu0 %v164
    %193 = vmatprep.subr.bf16.mxu0 0
    %194 = vmatpush1.bf16.msra.mxu0 0
    %195 = vmatprep.subr.bf16.mxu0 0
    %196 = vmatpush1.bf16.msra.mxu0 0
    %197 = vmatprep.subr.bf16.mxu0 0
    %198 = vmatpush1.bf16.msra.mxu0 0
    %199 = vmatprep.subr.bf16.mxu0 0
    %200 = vmatpush1.bf16.msra.mxu0 0
    %201 = vmatprep.subr.bf16.mxu0 0
    %202 = vmatpush1.bf16.msra.mxu0 0
    %203 = vmatprep.subr.bf16.mxu0 0
    %204 = vmatpush1.bf16.msra.mxu0 0
    %205 = vmatprep.subr.bf16.mxu0 0
    %206 = vmatpush1.bf16.msra.mxu0 0
    %207 = vmatprep.subr.bf16.mxu0 0
    %208 = vmatpush1.bf16.msra.mxu0 0
    %209 = vmatprep.mubr.bf16.mxu0 0
    %210 = vmatmul.mubr.bf16.gmra.mrb[0].mxu0 %v140
    %v211 = vpop.f32.mrb[0].mxu0
    %v212 = vadd.f32 %v176, %v211
    %v213 = vpop.f32.mrb[0].mxu0
    %v214 = vpop.f32.mrb[0].mxu0
    %v215 = vpop.f32.mrb[0].mxu0
    %216 = vdwg.mxu0
    %v217 = vld [vmem:[%s7] sm:$0x1]
    %v219 = vlaneseq
    %v220 = vshrl.u32 %v219, 7
    %v221 = vsub.s32 0, %v220
    %v222 = vrot.slane %v217, %v221
    %v224 = vadd.f32 %v212, %v222
    %v225 = vmax.f32 %v224, 0.0
    %v226 = vld [vmem:[%s8] sm:$0x1]
    %v228 = vlaneseq
    %v229 = vshrl.u32 %v228, 7
    %v230 = vsub.s32 0, %v229
    %v231 = vrot.slane %v226, %v230
    %v233 = vmul.f32 %v225, %v231
    %234 = vadd.xlane.f32.xlu0 %v233
    %v235 = vpop.xlane.xlu0 %234
    %s236 = sld [smem:[#allocation2]]
    %v237 = vstv %s236
    %v238 = vadd.f32 %v235, %v237
    %vm239 = vcmask 7168
    %240 = vst.msk [vmem:[%s10] sm:$0xff] %vm239, %v238
    // Predicated region
    $region50: #{tpu_custom_call.1} parent=1 // pred_check
      _
    $region51: #{tpu_custom_call.1} parent=1 // pred_check_branch
      %242 = sbr.rel (0) target = $region53
    $region52: #{tpu_custom_call.1} parent=1 // pred_region
      _
    $region53: #{tpu_custom_call.1} parent=1 // pred_fallthru
      _
    // Predicated region
    $region54: #{tpu_custom_call.1} parent=1 // pred_check
      _
    $region55: #{tpu_custom_call.1} parent=1 // pred_check_branch
      %244 = sbr.rel (0) target = $region57
    $region56: #{tpu_custom_call.1} parent=1 // pred_region
      _
    $region57: #{tpu_custom_call.1} parent=1 // pred_fallthru
      _
    %245 = vsyncpa [#allocation4], 1
    %246 = vsyncpa [#allocation6], 1

</llo_original>
